<compile_context>
chip_gen: v7x
topology: tpu7x:2x2x1
jax: 0.10.0
libtpu: 0.0.40
codegen_flags: <defaults>
</compile_context>

<pallas_src>
import functools

import jax
import jax.numpy as jnp
from jax import lax
from jax.experimental import pallas as pl
from jax.experimental.pallas import tpu as pltpu

_LANE = 128
_SUB = 8


def _round_up(x, m):
    return ((x + m - 1) // m) * m


def _vmem_limit_bytes():
    """Per-generation scoped VMEM limit (v4/v5e/v6e: 128 MiB phys, v7x: 64 MiB)."""
    try:
        kind = jax.devices()[0].device_kind.lower()
    except Exception:
        kind = ""
    if any(v in kind for v in ("v4", "v5", "v6")):
        return 96 * 1024 * 1024
    return 48 * 1024 * 1024  # conservative (v7x and unknown chips)


def _compiler_params():
    return pltpu.CompilerParams(
        dimension_semantics=("parallel",),
        vmem_limit_bytes=_vmem_limit_bytes(),
    )


def _xwT(x, w_ref, compute_dtype):
    # x: [R, K], w_ref: [O, K] -> [R, O] (== x @ w.T), f32 accumulation on MXU.
    return lax.dot_general(x.astype(compute_dtype), w_ref[...],
                           (((1,), (1,)), ((), ())),
                           preferred_element_type=jnp.float32)


# ---------------------------------------------------------------------------
# Kernel 1: node-side linear -> f32 node table (gather source for the edges).
# ---------------------------------------------------------------------------
def _node_table_kernel(compute_dtype, feat_ref, w_ref, b_ref, out_ref):
    out_ref[...] = (_xwT(feat_ref[...], w_ref, compute_dtype)
                    + b_ref[...]).astype(out_ref.dtype)


def _node_table(feat, w_p, b_row, tile_nodes, compute_dtype, cparams):
    n_rows, k = feat.shape
    h_p = w_p.shape[0]
    tile_n = _round_up(min(tile_nodes, n_rows), _SUB)
    grid = pl.cdiv(n_rows, tile_n)
    cost = pl.CostEstimate(
        flops=int(2 * n_rows * h_p * k),
        transcendentals=0,
        bytes_accessed=int(n_rows * k * feat.dtype.itemsize
                           + h_p * k * w_p.dtype.itemsize
                           + n_rows * h_p * 4),
    )
    return pl.pallas_call(
        functools.partial(_node_table_kernel, compute_dtype),
        grid=(grid,),
        in_specs=[pl.BlockSpec((tile_n, k), lambda g: (g, 0)),
                  pl.BlockSpec((h_p, k), lambda g: (0, 0)),
                  pl.BlockSpec((1, h_p), lambda g: (0, 0))],
        out_specs=pl.BlockSpec((tile_n, h_p), lambda g: (g, 0)),
        out_shape=jax.ShapeDtypeStruct((n_rows, h_p), jnp.float32),
        compiler_params=cparams,
        cost_estimate=cost,
    )(feat, w_p, b_row)


# ---------------------------------------------------------------------------
# Kernel 2: fused edge pipeline
#   in-kernel row gather (dynamic slices from VMEM-resident node tables,
#   indices on the scalar/SMEM path), edge-sum, SiLU+Linear hidden layers,
#   masked LayerNorm -- all in one pallas_call; h never touches HBM between
#   layers.
# ---------------------------------------------------------------------------
def _fused_edge_kernel(num_hidden, out_dim_real, eps, compute_dtype, *refs):
    # refs: (scalar prefetch) sidx, didx | efeat, msrc, mdst, w_efeat,
    #       (w_i, b_i)*num_hidden, gamma, beta | out | gather scratch
    sidx_ref, didx_ref, efeat_ref, msrc_ref, mdst_ref, w_e_ref = refs[:6]
    layer_refs = refs[6:6 + 2 * num_hidden]
    gamma_ref, beta_ref, out_ref, gath_ref = refs[6 + 2 * num_hidden:]

    t = efeat_ref.shape[0]
    base = pl.program_id(0) * t

    # Per-edge row gather of the node-MLP outputs, directly from the
    # VMEM-resident f32 tables (dynamic first-axis slices).  Padded tail
    # indices are 0, so gathers always stay in bounds; the corresponding
    # output rows are dropped by the ragged write-back.
    def gather_row(i, carry):
        s = sidx_ref[base + i]
        d = didx_ref[base + i]
        gath_ref[pl.ds(i, 1), :] = (msrc_ref[pl.ds(s, 1), :]
                                    + mdst_ref[pl.ds(d, 1), :])
        return carry

    lax.fori_loop(0, t, gather_row, 0)

    # Edge-sum: efeat @ W_efeat^T + gather(mlp_src) + gather(mlp_dst)
    # (the bias was already folded into mlp_dst).
    h = _xwT(efeat_ref[...], w_e_ref, compute_dtype) + gath_ref[...]

    # Hidden layers: SiLU in f32 (VPU/EUP), Linear on the MXU (f32 accum).
    for i in range(num_hidden):
        w_ref = layer_refs[2 * i]
        bl_ref = layer_refs[2 * i + 1]
        h = _xwT(jax.nn.silu(h), w_ref, compute_dtype) + bl_ref[...]

    # LayerNorm over the *real* output features only.  Padded lanes are masked
    # in the reductions and stay exactly 0 in xn (gamma/beta are zero-padded).
    o_pad = h.shape[-1]
    inv_n = 1.0 / float(out_dim_real)
    if o_pad == out_dim_real:
        mean = jnp.sum(h, axis=-1, keepdims=True) * inv_n
        diff = h - mean
    else:
        mask = lax.broadcasted_iota(jnp.int32, h.shape, 1) < out_dim_real
        mean = jnp.sum(jnp.where(mask, h, 0.0), axis=-1, keepdims=True) * inv_n
        diff = jnp.where(mask, h - mean, 0.0)
    var = jnp.sum(diff * diff, axis=-1, keepdims=True) * inv_n
    xn = diff * lax.rsqrt(var + eps)
    out_ref[...] = (xn * gamma_ref[...] + beta_ref[...]).astype(out_ref.dtype)


# ---------------------------------------------------------------------------
# Module: parameter init (PyTorch nn.Linear-style) + forward
# ---------------------------------------------------------------------------
def init_params(key, efeat_dim, src_dim, dst_dim, output_dim, hidden_dim,
                hidden_layers, bias=True):
    params = {}
    in_dim = efeat_dim + src_dim + dst_dim
    k0 = 1.0 / jnp.sqrt(jnp.float32(in_dim))
    key, kw, kb = jax.random.split(key, 3)
    w0 = jax.random.uniform(kw, (hidden_dim, in_dim), jnp.float32, -k0, k0)
    params["w_efeat"] = w0[:, :efeat_dim]
    params["w_src"] = w0[:, efeat_dim:efeat_dim + src_dim]
    params["w_dst"] = w0[:, efeat_dim + src_dim:]
    params["bias"] = (jax.random.uniform(kb, (hidden_dim,), jnp.float32, -k0, k0)
                      if bias else None)

    # Sequential: [SiLU] + (hidden_layers-1)*[Linear(H,H), SiLU] + [Linear(H,O)]
    # == repeat hidden_layers times: SiLU then Linear_i (last maps H -> O)
    hidden = []
    for i in range(hidden_layers):
        out_d = hidden_dim if i < hidden_layers - 1 else output_dim
        kl = 1.0 / jnp.sqrt(jnp.float32(hidden_dim))
        key, kw, kb = jax.random.split(key, 3)
        w = jax.random.uniform(kw, (out_d, hidden_dim), jnp.float32, -kl, kl)
        b = jax.random.uniform(kb, (out_d,), jnp.float32, -kl, kl)
        hidden.append((w, b))
    params["hidden"] = hidden

    # LayerNorm(output_dim) default init: gamma = 1, beta = 0, eps = 1e-5
    params["gamma"] = jnp.ones((output_dim,), jnp.float32)
    params["beta"] = jnp.zeros((output_dim,), jnp.float32)
    return params


def mesh_graph_edge_mlp_sum_forward(params, efeat, src_feat, dst_feat,
                                    src_idx, dst_idx, *, tile_edges=512,
                                    tile_nodes=512,
                                    compute_dtype=jnp.bfloat16):
    E, Ke = efeat.shape
    Ns = src_feat.shape[0]
    Nd = dst_feat.shape[0]
    H = params["w_src"].shape[0]
    O = params["hidden"][-1][0].shape[0]
    num_hidden = len(params["hidden"])

    H_p, O_p = _round_up(H, _LANE), _round_up(O, _LANE)
    f32 = jnp.float32
    cdt = jnp.dtype(compute_dtype)
    cparams = _compiler_params()

    # --- node-side linears -> f32 node tables (VMEM gather sources) --------
    ws_p = jnp.pad(params["w_src"], ((0, H_p - H), (0, 0))).astype(cdt)
    wd_p = jnp.pad(params["w_dst"], ((0, H_p - H), (0, 0))).astype(cdt)
    bias = params["bias"] if params["bias"] is not None else jnp.zeros((H,), f32)
    b_row = jnp.pad(bias.astype(f32), (0, H_p - H)).reshape(1, H_p)
    zero_row = jnp.zeros((1, H_p), f32)

    msrc = _node_table(src_feat, ws_p, zero_row, tile_nodes, compute_dtype, cparams)
    mdst = _node_table(dst_feat, wd_p, b_row, tile_nodes, compute_dtype, cparams)

    # --- fused edge pipeline -------------------------------------------------
    tile_e = _round_up(min(tile_edges, E), _SUB)
    e_grid = pl.cdiv(E, tile_e)
    idx_len = e_grid * tile_e
    sidx = jnp.pad(src_idx.astype(jnp.int32), (0, idx_len - E))
    didx = jnp.pad(dst_idx.astype(jnp.int32), (0, idx_len - E))

    we_p = jnp.pad(params["w_efeat"], ((0, H_p - H), (0, 0))).astype(cdt)

    in_specs = [
        pl.BlockSpec((tile_e, Ke), lambda g, si, di: (g, 0)),   # efeat (streamed)
        pl.BlockSpec((Ns, H_p), lambda g, si, di: (0, 0)),      # msrc table (resident)
        pl.BlockSpec((Nd, H_p), lambda g, si, di: (0, 0)),      # mdst table (resident)
        pl.BlockSpec((H_p, Ke), lambda g, si, di: (0, 0)),      # w_efeat
    ]
    operands = [efeat, msrc, mdst, we_p]

    flops = 2 * E * H_p * Ke
    param_bytes = we_p.size * cdt.itemsize
    for i, (w, b) in enumerate(params["hidden"]):
        out_d = H_p if i < num_hidden - 1 else O_p
        w_p = jnp.pad(w, ((0, out_d - w.shape[0]), (0, H_p - H))).astype(cdt)
        bp = jnp.pad(b.astype(f32), (0, out_d - b.shape[0])).reshape(1, out_d)
        in_specs.append(pl.BlockSpec((out_d, H_p), lambda g, si, di: (0, 0)))
        in_specs.append(pl.BlockSpec((1, out_d), lambda g, si, di: (0, 0)))
        operands += [w_p, bp]
        flops += 2 * E * H_p * out_d
        param_bytes += w_p.size * cdt.itemsize + bp.size * 4

    gamma_p = jnp.pad(params["gamma"].astype(f32), (0, O_p - O)).reshape(1, O_p)
    beta_p = jnp.pad(params["beta"].astype(f32), (0, O_p - O)).reshape(1, O_p)
    in_specs += [pl.BlockSpec((1, O_p), lambda g, si, di: (0, 0)),
                 pl.BlockSpec((1, O_p), lambda g, si, di: (0, 0))]
    operands += [gamma_p, beta_p]

    edge_cost = pl.CostEstimate(
        flops=int(flops),
        transcendentals=int(E * H_p * num_hidden),
        bytes_accessed=int(E * Ke * efeat.dtype.itemsize
                           + (Ns + Nd) * H_p * 4
                           + E * O_p * 4
                           + 2 * idx_len * 4
                           + param_bytes),
    )

    grid_spec = pltpu.PrefetchScalarGridSpec(
        num_scalar_prefetch=2,
        grid=(e_grid,),
        in_specs=in_specs,
        out_specs=pl.BlockSpec((tile_e, O_p), lambda g, si, di: (g, 0)),
        scratch_shapes=[pltpu.VMEM((tile_e, H_p), f32)],
    )
    out_p = pl.pallas_call(
        functools.partial(_fused_edge_kernel, num_hidden, O, 1e-5, compute_dtype),
        grid_spec=grid_spec,
        out_shape=jax.ShapeDtypeStruct((E, O_p), f32),
        compiler_params=cparams,
        cost_estimate=edge_cost,
    )(sidx, didx, *operands)

    return out_p[:, :O] if O_p != O else out_p


# ---------------------------------------------------------------------------
# Pure-JAX reference (same semantics as the PyTorch forward)
# ---------------------------------------------------------------------------
def reference_forward(params, efeat, src_feat, dst_feat, src_idx, dst_idx):
    mlp_e = efeat @ params["w_efeat"].T
    mlp_s = src_feat @ params["w_src"].T
    mlp_d = dst_feat @ params["w_dst"].T
    if params["bias"] is not None:
        mlp_d = mlp_d + params["bias"]
    h = mlp_e + mlp_s[src_idx] + mlp_d[dst_idx]
    for w, b in params["hidden"]:
        h = jax.nn.silu(h) @ w.T + b
    mean = h.mean(-1, keepdims=True)
    var = ((h - mean) ** 2).mean(-1, keepdims=True)
    return (h - mean) / jnp.sqrt(var + 1e-5) * params["gamma"] + params["beta"]


# ---------------------------------------------------------------------------
if __name__ == "__main__":
    key = jax.random.PRNGKey(0)

    def run_case(case_key, E, Ns, Nd, efeat_dim, src_dim, dst_dim, hidden_dim,
                 output_dim, hidden_layers, **fwd_kwargs):
        kp, ke, ks, kd, ki1, ki2 = jax.random.split(case_key, 6)
        params = init_params(kp, efeat_dim, src_dim, dst_dim, output_dim,
                             hidden_dim, hidden_layers, bias=True)
        efeat = jax.random.normal(ke, (E, efeat_dim), jnp.float32)
        src_feat = jax.random.normal(ks, (Ns, src_dim), jnp.float32)
        dst_feat = jax.random.normal(kd, (Nd, dst_dim), jnp.float32)
        src_idx = jax.random.randint(ki1, (E,), 0, Ns, jnp.int32)
        dst_idx = jax.random.randint(ki2, (E,), 0, Nd, jnp.int32)
        fwd = jax.jit(functools.partial(mesh_graph_edge_mlp_sum_forward,
                                        **fwd_kwargs))
        out = jax.block_until_ready(
            fwd(params, efeat, src_feat, dst_feat, src_idx, dst_idx))
        ref = reference_forward(params, efeat, src_feat, dst_feat,
                                src_idx, dst_idx)
        return out, ref

    k1, k2 = jax.random.split(key)

    # Case 1: aligned sizes, f32 matmul path -> tight check vs reference.
    out, ref = run_case(k1, E=64, Ns=32, Nd=32, efeat_dim=16, src_dim=8,
                        dst_dim=8, hidden_dim=32, output_dim=32,
                        hidden_layers=2, compute_dtype=jnp.float32)
    assert out.shape == ref.shape == (64, 32), out.shape
    assert jnp.allclose(out, ref, atol=1e-4, rtol=1e-4), (
        float(jnp.max(jnp.abs(out - ref))))

    # Case 2: ragged edge/node counts, bipartite node sets, 1 hidden layer,
    # small tiles to force multiple (and ragged) grid blocks; still f32.
    out2, ref2 = run_case(k2, E=70, Ns=13, Nd=20, efeat_dim=10, src_dim=6,
                          dst_dim=7, hidden_dim=48, output_dim=40,
                          hidden_layers=1, tile_edges=32, tile_nodes=8,
                          compute_dtype=jnp.float32)
    assert out2.shape == ref2.shape == (70, 40), out2.shape
    assert jnp.allclose(out2, ref2, atol=1e-4, rtol=1e-4), (
        float(jnp.max(jnp.abs(out2 - ref2))))

    # Case 3: default bf16 matmul-input path (f32 accumulation, f32 gather /
    # SiLU / LayerNorm math) -> loose tolerance.
    out3, ref3 = run_case(k1, E=64, Ns=32, Nd=32, efeat_dim=16, src_dim=8,
                          dst_dim=8, hidden_dim=32, output_dim=32,
                          hidden_layers=2)
    assert out3.shape == (64, 32)
    assert bool(jnp.all(jnp.isfinite(out3)))
    assert float(jnp.max(jnp.abs(out3 - ref3))) < 0.25

    print("KERNEL_OK")
</pallas_src>

<mosaic_0001>
module attributes {stable_mosaic.version = 11 : i64} {
  func.func @_node_table_kernel(%arg0: i32, %arg1: memref<32x8xf32, #tpu.memory_space<vmem>>, %arg2: memref<128x8xf32, #tpu.memory_space<vmem>>, %arg3: memref<1x128xf32, #tpu.memory_space<vmem>>, %arg4: memref<32x128xf32, #tpu.memory_space<vmem>>) attributes {dimension_semantics = [#tpu.dimension_semantics<parallel>], iteration_bounds = array<i64: 1>, scalar_prefetch = 0 : i64, scratch_operands = 0 : i64, tpu.core_type = #tpu.core_type<tc>, window_params = [{transform_indices = @transform_0, window_bounds = array<i64: 32, 8>}, {pipeline_mode = #tpu.pipeline_mode<synchronous>, transform_indices = @transform_1, window_bounds = array<i64: 128, 8>}, {pipeline_mode = #tpu.pipeline_mode<synchronous>, transform_indices = @transform_2, window_bounds = array<i64: 1, 128>}, {transform_indices = @transform_3, window_bounds = array<i64: 32, 128>}]} {
    %c0 = arith.constant 0 : index
    %c0_0 = arith.constant 0 : index
    %0 = vector.load %arg1[%c0, %c0_0] : memref<32x8xf32, #tpu.memory_space<vmem>>, vector<32x8xf32>
    %c0_1 = arith.constant 0 : index
    %c0_2 = arith.constant 0 : index
    %1 = vector.load %arg2[%c0_1, %c0_2] : memref<128x8xf32, #tpu.memory_space<vmem>>, vector<128x8xf32>
    %cst = arith.constant dense<0.000000e+00> : vector<32x128xf32>
    %2 = tpu.matmul %0, %1, %cst {dimension_numbers = #tpu.dot_dimension_numbers<[1], [1], [0], [0], [0, 0, 1, 0], [], []>} : vector<32x8xf32>, vector<128x8xf32>, vector<32x128xf32> -> vector<32x128xf32>
    %c0_3 = arith.constant 0 : index
    %c0_4 = arith.constant 0 : index
    %3 = vector.load %arg3[%c0_3, %c0_4] : memref<1x128xf32, #tpu.memory_space<vmem>>, vector<1x128xf32>
    %4 = vector.broadcast %3 : vector<1x128xf32> to vector<32x128xf32>
    %5 = arith.addf %2, %4 : vector<32x128xf32>
    %c0_5 = arith.constant 0 : index
    %c0_6 = arith.constant 0 : index
    %6 = vector.load %arg4[%c0_5, %c0_6] : memref<32x128xf32, #tpu.memory_space<vmem>>, vector<32x128xf32>
    tpu.vector_store %arg4[%c0_5, %c0_6], %5 {strides = array<i32>} : memref<32x128xf32, #tpu.memory_space<vmem>>, vector<32x128xf32>,
    return
  }
  func.func @transform_0(%arg0: i32) -> (i32, i32) {
    %c0_i32 = arith.constant 0 : i32
    %c0_i32_0 = arith.constant 0 : i32
    return %arg0, %c0_i32 : i32, i32
  }
  func.func @transform_1(%arg0: i32) -> (i32, i32) {
    %c0_i32 = arith.constant 0 : i32
    %c0_i32_0 = arith.constant 0 : i32
    %c0_i32_1 = arith.constant 0 : i32
    return %c0_i32, %c0_i32_0 : i32, i32
  }
  func.func @transform_2(%arg0: i32) -> (i32, i32) {
    %c0_i32 = arith.constant 0 : i32
    %c0_i32_0 = arith.constant 0 : i32
    %c0_i32_1 = arith.constant 0 : i32
    return %c0_i32, %c0_i32_0 : i32, i32
  }
  func.func @transform_3(%arg0: i32) -> (i32, i32) {
    %c0_i32 = arith.constant 0 : i32
    %c0_i32_0 = arith.constant 0 : i32
    return %arg0, %c0_i32 : i32, i32
  }
}

module attributes {stable_mosaic.version = 11 : i64} {
  func.func @_fused_edge_kernel(%arg0: i32, %arg1: memref<64xi32, #tpu.memory_space<smem>>, %arg2: memref<64xi32, #tpu.memory_space<smem>>, %arg3: memref<64x16xf32, #tpu.memory_space<vmem>>, %arg4: memref<32x128xf32, #tpu.memory_space<vmem>>, %arg5: memref<32x128xf32, #tpu.memory_space<vmem>>, %arg6: memref<128x16xf32, #tpu.memory_space<vmem>>, %arg7: memref<128x128xf32, #tpu.memory_space<vmem>>, %arg8: memref<1x128xf32, #tpu.memory_space<vmem>>, %arg9: memref<128x128xf32, #tpu.memory_space<vmem>>, %arg10: memref<1x128xf32, #tpu.memory_space<vmem>>, %arg11: memref<1x128xf32, #tpu.memory_space<vmem>>, %arg12: memref<1x128xf32, #tpu.memory_space<vmem>>, %arg13: memref<64x128xf32, #tpu.memory_space<vmem>>, %arg14: memref<64x128xf32, #tpu.memory_space<vmem>>) attributes {dimension_semantics = [#tpu.dimension_semantics<parallel>], iteration_bounds = array<i64: 1>, scalar_prefetch = 2 : i64, scratch_operands = 1 : i64, tpu.core_type = #tpu.core_type<tc>, window_params = [{transform_indices = @transform_0, window_bounds = array<i64: 64, 16>}, {pipeline_mode = #tpu.pipeline_mode<synchronous>, transform_indices = @transform_1, window_bounds = array<i64: 32, 128>}, {pipeline_mode = #tpu.pipeline_mode<synchronous>, transform_indices = @transform_2, window_bounds = array<i64: 32, 128>}, {pipeline_mode = #tpu.pipeline_mode<synchronous>, transform_indices = @transform_3, window_bounds = array<i64: 128, 16>}, {pipeline_mode = #tpu.pipeline_mode<synchronous>, transform_indices = @transform_4, window_bounds = array<i64: 128, 128>}, {pipeline_mode = #tpu.pipeline_mode<synchronous>, transform_indices = @transform_5, window_bounds = array<i64: 1, 128>}, {pipeline_mode = #tpu.pipeline_mode<synchronous>, transform_indices = @transform_6, window_bounds = array<i64: 128, 128>}, {pipeline_mode = #tpu.pipeline_mode<synchronous>, transform_indices = @transform_7, window_bounds = array<i64: 1, 128>}, {pipeline_mode = #tpu.pipeline_mode<synchronous>, transform_indices = @transform_8, window_bounds = array<i64: 1, 128>}, {pipeline_mode = #tpu.pipeline_mode<synchronous>, transform_indices = @transform_9, window_bounds = array<i64: 1, 128>}, {transform_indices = @transform_10, window_bounds = array<i64: 64, 128>}]} {
    %c64_i32 = arith.constant 64 : i32
    %0 = arith.muli %arg0, %c64_i32 : i32
    %c0_i32 = arith.constant 0 : i32
    %c64_i32_0 = arith.constant 64 : i32
    %1 = arith.addi %c0_i32, %c64_i32_0 : i32
    %c1_i32 = arith.constant 1 : i32
    scf.for %arg15 = %c0_i32 to %1 step %c1_i32  : i32 {
      %59 = arith.addi %0, %arg15 : i32
      %60 = arith.index_cast %59 : i32 to index
      %61 = memref.load %arg1[%60] : memref<64xi32, #tpu.memory_space<smem>>
      %62 = arith.addi %0, %arg15 : i32
      %63 = arith.index_cast %62 : i32 to index
      %64 = memref.load %arg2[%63] : memref<64xi32, #tpu.memory_space<smem>>
      %65 = arith.index_cast %61 : i32 to index
      %c0_32 = arith.constant 0 : index
      %66 = vector.load %arg4[%65, %c0_32] : memref<32x128xf32, #tpu.memory_space<vmem>>, vector<1x128xf32>
      %67 = arith.index_cast %64 : i32 to index
      %c0_33 = arith.constant 0 : index
      %68 = vector.load %arg5[%67, %c0_33] : memref<32x128xf32, #tpu.memory_space<vmem>>, vector<1x128xf32>
      %69 = arith.addf %66, %68 : vector<1x128xf32>
      %70 = arith.index_cast %arg15 : i32 to index
      %c0_34 = arith.constant 0 : index
      %71 = vector.load %arg14[%70, %c0_34] : memref<64x128xf32, #tpu.memory_space<vmem>>, vector<1x128xf32>
      tpu.vector_store %arg14[%70, %c0_34], %69 {strides = array<i32>} : memref<64x128xf32, #tpu.memory_space<vmem>>, vector<1x128xf32>,
    }
    %c64_i32_1 = arith.constant 64 : i32
    %c0 = arith.constant 0 : index
    %c0_2 = arith.constant 0 : index
    %2 = vector.load %arg3[%c0, %c0_2] : memref<64x16xf32, #tpu.memory_space<vmem>>, vector<64x16xf32>
    %c0_3 = arith.constant 0 : index
    %c0_4 = arith.constant 0 : index
    %3 = vector.load %arg6[%c0_3, %c0_4] : memref<128x16xf32, #tpu.memory_space<vmem>>, vector<128x16xf32>
    %cst = arith.constant dense<0.000000e+00> : vector<64x128xf32>
    %4 = tpu.matmul %2, %3, %cst {dimension_numbers = #tpu.dot_dimension_numbers<[1], [1], [0], [0], [0, 0, 1, 0], [], []>} : vector<64x16xf32>, vector<128x16xf32>, vector<64x128xf32> -> vector<64x128xf32>
    %c0_5 = arith.constant 0 : index
    %c0_6 = arith.constant 0 : index
    %5 = vector.load %arg14[%c0_5, %c0_6] : memref<64x128xf32, #tpu.memory_space<vmem>>, vector<64x128xf32>
    %6 = arith.addf %4, %5 : vector<64x128xf32>
    %7 = arith.negf %6 : vector<64x128xf32>
    %8 = math.exp %7 : vector<64x128xf32>
    %cst_7 = arith.constant 1.000000e+00 : f32
    %9 = vector.broadcast %cst_7 : f32 to vector<64x128xf32>
    %10 = arith.addf %9, %8 : vector<64x128xf32>
    %11 = arith.divf %9, %10 : vector<64x128xf32>
    %12 = arith.mulf %6, %11 : vector<64x128xf32>
    %c0_8 = arith.constant 0 : index
    %c0_9 = arith.constant 0 : index
    %13 = vector.load %arg7[%c0_8, %c0_9] : memref<128x128xf32, #tpu.memory_space<vmem>>, vector<128x128xf32>
    %cst_10 = arith.constant dense<0.000000e+00> : vector<64x128xf32>
    %14 = tpu.matmul %12, %13, %cst_10 {dimension_numbers = #tpu.dot_dimension_numbers<[1], [1], [0], [0], [0, 0, 1, 0], [], []>} : vector<64x128xf32>, vector<128x128xf32>, vector<64x128xf32> -> vector<64x128xf32>
    %c0_11 = arith.constant 0 : index
    %c0_12 = arith.constant 0 : index
    %15 = vector.load %arg8[%c0_11, %c0_12] : memref<1x128xf32, #tpu.memory_space<vmem>>, vector<1x128xf32>
    %16 = vector.broadcast %15 : vector<1x128xf32> to vector<64x128xf32>
    %17 = arith.addf %14, %16 : vector<64x128xf32>
    %18 = arith.negf %17 : vector<64x128xf32>
    %19 = math.exp %18 : vector<64x128xf32>
    %cst_13 = arith.constant 1.000000e+00 : f32
    %20 = vector.broadcast %cst_13 : f32 to vector<64x128xf32>
    %21 = arith.addf %20, %19 : vector<64x128xf32>
    %22 = arith.divf %20, %21 : vector<64x128xf32>
    %23 = arith.mulf %17, %22 : vector<64x128xf32>
    %c0_14 = arith.constant 0 : index
    %c0_15 = arith.constant 0 : index
    %24 = vector.load %arg9[%c0_14, %c0_15] : memref<128x128xf32, #tpu.memory_space<vmem>>, vector<128x128xf32>
    %cst_16 = arith.constant dense<0.000000e+00> : vector<64x128xf32>
    %25 = tpu.matmul %23, %24, %cst_16 {dimension_numbers = #tpu.dot_dimension_numbers<[1], [1], [0], [0], [0, 0, 1, 0], [], []>} : vector<64x128xf32>, vector<128x128xf32>, vector<64x128xf32> -> vector<64x128xf32>
    %c0_17 = arith.constant 0 : index
    %c0_18 = arith.constant 0 : index
    %26 = vector.load %arg10[%c0_17, %c0_18] : memref<1x128xf32, #tpu.memory_space<vmem>>, vector<1x128xf32>
    %27 = vector.broadcast %26 : vector<1x128xf32> to vector<64x128xf32>
    %28 = arith.addf %25, %27 : vector<64x128xf32>
    %29 = tpu.iota {dimensions = array<i32: 1>} : vector<64x128xi32>
    %c32_i32 = arith.constant 32 : i32
    %30 = vector.broadcast %c32_i32 : i32 to vector<64x128xi32>
    %31 = arith.cmpi slt, %29, %30 : vector<64x128xi32>
    %cst_19 = arith.constant 0.000000e+00 : f32
    %32 = vector.broadcast %cst_19 : f32 to vector<64x128xf32>
    %33 = arith.select %31, %28, %32 : vector<64x128xi1>, vector<64x128xf32>
    %cst_20 = arith.constant dense<0.000000e+00> : vector<64xf32>
    %34 = vector.multi_reduction <add>, %33, %cst_20 [1] : vector<64x128xf32> to vector<64xf32>
    %35 = vector.shape_cast %34 : vector<64xf32> to vector<64x1xf32>
    %cst_21 = arith.constant 3.125000e-02 : f32
    %36 = vector.broadcast %cst_21 : f32 to vector<64x1xf32>
    %37 = arith.mulf %35, %36 : vector<64x1xf32>
    %38 = vector.broadcast %37 : vector<64x1xf32> to vector<64x128xf32>
    %39 = arith.subf %28, %38 : vector<64x128xf32>
    %cst_22 = arith.constant 0.000000e+00 : f32
    %40 = vector.broadcast %cst_22 : f32 to vector<64x128xf32>
    %41 = arith.select %31, %39, %40 : vector<64x128xi1>, vector<64x128xf32>
    %42 = arith.mulf %41, %41 : vector<64x128xf32>
    %cst_23 = arith.constant dense<0.000000e+00> : vector<64xf32>
    %43 = vector.multi_reduction <add>, %42, %cst_23 [1] : vector<64x128xf32> to vector<64xf32>
    %44 = vector.shape_cast %43 : vector<64xf32> to vector<64x1xf32>
    %cst_24 = arith.constant 3.125000e-02 : f32
    %45 = vector.broadcast %cst_24 : f32 to vector<64x1xf32>
    %46 = arith.mulf %44, %45 : vector<64x1xf32>
    %cst_25 = arith.constant 9.99999974E-6 : f32
    %47 = vector.broadcast %cst_25 : f32 to vector<64x1xf32>
    %48 = arith.addf %46, %47 : vector<64x1xf32>
    %49 = math.rsqrt %48 : vector<64x1xf32>
    %50 = vector.broadcast %49 : vector<64x1xf32> to vector<64x128xf32>
    %51 = arith.mulf %41, %50 : vector<64x128xf32>
    %c0_26 = arith.constant 0 : index
    %c0_27 = arith.constant 0 : index
    %52 = vector.load %arg11[%c0_26, %c0_27] : memref<1x128xf32, #tpu.memory_space<vmem>>, vector<1x128xf32>
    %53 = vector.broadcast %52 : vector<1x128xf32> to vector<64x128xf32>
    %54 = arith.mulf %51, %53 : vector<64x128xf32>
    %c0_28 = arith.constant 0 : index
    %c0_29 = arith.constant 0 : index
    %55 = vector.load %arg12[%c0_28, %c0_29] : memref<1x128xf32, #tpu.memory_space<vmem>>, vector<1x128xf32>
    %56 = vector.broadcast %55 : vector<1x128xf32> to vector<64x128xf32>
    %57 = arith.addf %54, %56 : vector<64x128xf32>
    %c0_30 = arith.constant 0 : index
    %c0_31 = arith.constant 0 : index
    %58 = vector.load %arg13[%c0_30, %c0_31] : memref<64x128xf32, #tpu.memory_space<vmem>>, vector<64x128xf32>
    tpu.vector_store %arg13[%c0_30, %c0_31], %57 {strides = array<i32>} : memref<64x128xf32, #tpu.memory_space<vmem>>, vector<64x128xf32>,
    return
  }
  func.func @transform_0(%arg0: i32, %arg1: memref<64xi32, #tpu.memory_space<smem>>, %arg2: memref<64xi32, #tpu.memory_space<smem>>) -> (i32, i32) {
    %c0_i32 = arith.constant 0 : i32
    %c0_i32_0 = arith.constant 0 : i32
    return %arg0, %c0_i32 : i32, i32
  }
  func.func @transform_1(%arg0: i32, %arg1: memref<64xi32, #tpu.memory_space<smem>>, %arg2: memref<64xi32, #tpu.memory_space<smem>>) -> (i32, i32) {
    %c0_i32 = arith.constant 0 : i32
    %c0_i32_0 = arith.constant 0 : i32
    %c0_i32_1 = arith.constant 0 : i32
    return %c0_i32, %c0_i32_0 : i32, i32
  }
  func.func @transform_2(%arg0: i32, %arg1: memref<64xi32, #tpu.memory_space<smem>>, %arg2: memref<64xi32, #tpu.memory_space<smem>>) -> (i32, i32) {
    %c0_i32 = arith.constant 0 : i32
    %c0_i32_0 = arith.constant 0 : i32
    %c0_i32_1 = arith.constant 0 : i32
    return %c0_i32, %c0_i32_0 : i32, i32
  }
  func.func @transform_3(%arg0: i32, %arg1: memref<64xi32, #tpu.memory_space<smem>>, %arg2: memref<64xi32, #tpu.memory_space<smem>>) -> (i32, i32) {
    %c0_i32 = arith.constant 0 : i32
    %c0_i32_0 = arith.constant 0 : i32
    %c0_i32_1 = arith.constant 0 : i32
    return %c0_i32, %c0_i32_0 : i32, i32
  }
  func.func @transform_4(%arg0: i32, %arg1: memref<64xi32, #tpu.memory_space<smem>>, %arg2: memref<64xi32, #tpu.memory_space<smem>>) -> (i32, i32) {
    %c0_i32 = arith.constant 0 : i32
    %c0_i32_0 = arith.constant 0 : i32
    %c0_i32_1 = arith.constant 0 : i32
    return %c0_i32, %c0_i32_0 : i32, i32
  }
  func.func @transform_5(%arg0: i32, %arg1: memref<64xi32, #tpu.memory_space<smem>>, %arg2: memref<64xi32, #tpu.memory_space<smem>>) -> (i32, i32) {
    %c0_i32 = arith.constant 0 : i32
    %c0_i32_0 = arith.constant 0 : i32
    %c0_i32_1 = arith.constant 0 : i32
    return %c0_i32, %c0_i32_0 : i32, i32
  }
  func.func @transform_6(%arg0: i32, %arg1: memref<64xi32, #tpu.memory_space<smem>>, %arg2: memref<64xi32, #tpu.memory_space<smem>>) -> (i32, i32) {
    %c0_i32 = arith.constant 0 : i32
    %c0_i32_0 = arith.constant 0 : i32
    %c0_i32_1 = arith.constant 0 : i32
    return %c0_i32, %c0_i32_0 : i32, i32
  }
  func.func @transform_7(%arg0: i32, %arg1: memref<64xi32, #tpu.memory_space<smem>>, %arg2: memref<64xi32, #tpu.memory_space<smem>>) -> (i32, i32) {
    %c0_i32 = arith.constant 0 : i32
    %c0_i32_0 = arith.constant 0 : i32
    %c0_i32_1 = arith.constant 0 : i32
    return %c0_i32, %c0_i32_0 : i32, i32
  }
  func.func @transform_8(%arg0: i32, %arg1: memref<64xi32, #tpu.memory_space<smem>>, %arg2: memref<64xi32, #tpu.memory_space<smem>>) -> (i32, i32) {
    %c0_i32 = arith.constant 0 : i32
    %c0_i32_0 = arith.constant 0 : i32
    %c0_i32_1 = arith.constant 0 : i32
    return %c0_i32, %c0_i32_0 : i32, i32
  }
  func.func @transform_9(%arg0: i32, %arg1: memref<64xi32, #tpu.memory_space<smem>>, %arg2: memref<64xi32, #tpu.memory_space<smem>>) -> (i32, i32) {
    %c0_i32 = arith.constant 0 : i32
    %c0_i32_0 = arith.constant 0 : i32
    %c0_i32_1 = arith.constant 0 : i32
    return %c0_i32, %c0_i32_0 : i32, i32
  }
  func.func @transform_10(%arg0: i32, %arg1: memref<64xi32, #tpu.memory_space<smem>>, %arg2: memref<64xi32, #tpu.memory_space<smem>>) -> (i32, i32) {
    %c0_i32 = arith.constant 0 : i32
    %c0_i32_0 = arith.constant 0 : i32
    return %arg0, %c0_i32 : i32, i32
  }
}

</mosaic_0001>

<llo_original>
// kernel: mesh_graph_edge_mlp_sum_forward.3
$region0: #{mesh_graph_edge_mlp_sum_forward.3}
  #allocation0 [shape = 'u32[]', space=smem, size = 0x4, offset = 0x4, fixed_abs, tag = 'smem constant byte address 0x4 - core index']
  #allocation1 [shape = 'u32[144,128]{1,0:T(1,128)}', space=vmem, size = 0x12000, scoped, tag = 'internal scratch']
  %s0 = inlined_call_operand.vmem [shape: f32[32,8], index: 0, kind: input, shape index: {}]
  %s1 = inlined_call_operand.vmem [shape: f32[128,8], index: 1, kind: input, shape index: {}]
  %s2 = inlined_call_operand.vmem [shape: f32[1,128], index: 2, kind: input, shape index: {}]
  %s3 = inlined_call_operand.vmem [shape: f32[32,128], index: 3, kind: output, shape index: {}]
  %s4 = sld [smem:[#allocation0]]
  $region22: #{mesh_graph_edge_mlp_sum_forward.3} parent=0
    _
  %s6 = ssub.s32 1, %s4
  %s7 = scalar_select 0, %s6, %s4
  // Predicated region
  $region2: #{mesh_graph_edge_mlp_sum_forward.3} parent=0 // pred_check
    _
  $region3: #{mesh_graph_edge_mlp_sum_forward.3} parent=0 // pred_check_branch
    %9 = sbr.rel (0) target = $region5
  $region4: #{mesh_graph_edge_mlp_sum_forward.3} parent=0 // pred_region
    _
  $region5: #{mesh_graph_edge_mlp_sum_forward.3} parent=0 // pred_fallthru
    _
  // Predicated region
  $region6: #{mesh_graph_edge_mlp_sum_forward.3} parent=0 // pred_check
    _
  $region7: #{mesh_graph_edge_mlp_sum_forward.3} parent=0 // pred_check_branch
    %11 = sbr.rel (0) target = $region9
  $region8: #{mesh_graph_edge_mlp_sum_forward.3} parent=0 // pred_region
    _
  $region9: #{mesh_graph_edge_mlp_sum_forward.3} parent=0 // pred_fallthru
    _
  // Predicated region
  $region10: #{mesh_graph_edge_mlp_sum_forward.3} parent=0 // pred_check
    _
  $region11: #{mesh_graph_edge_mlp_sum_forward.3} parent=0 // pred_check_branch
    %13 = sbr.rel (0) target = $region13
  $region12: #{mesh_graph_edge_mlp_sum_forward.3} parent=0 // pred_region
    _
  $region13: #{mesh_graph_edge_mlp_sum_forward.3} parent=0 // pred_fallthru
    _
  %v14 = vld [vmem:[%s0] sm:$0xff]
  %v15 = vld [vmem:[%s0 + $0x8] sm:$0xff]
  %v16 = vld [vmem:[%s0 + $0x10] sm:$0xff]
  %v17 = vld [vmem:[%s0 + $0x18] sm:$0xff]
  %v18 = vld [vmem:[%s1] sm:$0xff]
  %v19 = vld [vmem:[%s1 + $0x8] sm:$0xff]
  %v20 = vld [vmem:[%s1 + $0x10] sm:$0xff]
  %v21 = vld [vmem:[%s1 + $0x18] sm:$0xff]
  %v22 = vld [vmem:[%s1 + $0x20] sm:$0xff]
  %v23 = vld [vmem:[%s1 + $0x28] sm:$0xff]
  %v24 = vld [vmem:[%s1 + $0x30] sm:$0xff]
  %v25 = vld [vmem:[%s1 + $0x38] sm:$0xff]
  %v26 = vld [vmem:[%s1 + $0x40] sm:$0xff]
  %v27 = vld [vmem:[%s1 + $0x48] sm:$0xff]
  %v28 = vld [vmem:[%s1 + $0x50] sm:$0xff]
  %v29 = vld [vmem:[%s1 + $0x58] sm:$0xff]
  %v30 = vld [vmem:[%s1 + $0x60] sm:$0xff]
  %v31 = vld [vmem:[%s1 + $0x68] sm:$0xff]
  %v32 = vld [vmem:[%s1 + $0x70] sm:$0xff]
  %v33 = vld [vmem:[%s1 + $0x78] sm:$0xff]
  %v34 = vld [vmem:[%s2] sm:$0x1]
  %v36 = vlaneseq
  %v37 = vshrl.u32 %v36, 7
  %v38 = vsub.s32 0, %v37
  %v39 = vrot.slane %v34, %v38
  %vm41 = vcmask 64512
  %v43 = vsel %vm41, %v14, 0
  %v46 = vsel %vm41, %v15, 0
  %v49 = vsel %vm41, %v16, 0
  %v52 = vsel %vm41, %v17, 0
  %v55 = vsel %vm41, %v18, 0
  %v58 = vsel %vm41, %v19, 0
  %v61 = vsel %vm41, %v20, 0
  %v64 = vsel %vm41, %v21, 0
  %v67 = vsel %vm41, %v22, 0
  %v70 = vsel %vm41, %v23, 0
  %v73 = vsel %vm41, %v24, 0
  %v76 = vsel %vm41, %v25, 0
  %v79 = vsel %vm41, %v26, 0
  %v82 = vsel %vm41, %v27, 0
  %v85 = vsel %vm41, %v28, 0
  %v88 = vsel %vm41, %v29, 0
  %v91 = vsel %vm41, %v30, 0
  %v94 = vsel %vm41, %v31, 0
  %v97 = vsel %vm41, %v32, 0
  %v100 = vsel %vm41, %v33, 0
  %102 = vmatprep.subr.mxu0 0.0
  %103 = vmatpush1.xpose.msra.mxu0 %v55
  %104 = vmatprep.subr.mxu0 0.0
  %105 = vmatpush1.xpose.msra.mxu0 %v58
  %106 = vmatprep.subr.mxu0 0.0
  %107 = vmatpush1.xpose.msra.mxu0 %v61
  %108 = vmatprep.subr.mxu0 0.0
  %109 = vmatpush1.xpose.msra.mxu0 %v64
  %110 = vmatprep.subr.mxu0 0.0
  %111 = vmatpush1.xpose.msra.mxu0 %v67
  %112 = vmatprep.subr.mxu0 0.0
  %113 = vmatpush1.xpose.msra.mxu0 %v70
  %114 = vmatprep.subr.mxu0 0.0
  %115 = vmatpush1.xpose.msra.mxu0 %v73
  %116 = vmatprep.subr.mxu0 0.0
  %117 = vmatpush1.xpose.msra.mxu0 %v76
  %118 = vmatprep.subr.mxu0 0.0
  %119 = vmatpush1.xpose.msra.mxu0 %v79
  %120 = vmatprep.subr.mxu0 0.0
  %121 = vmatpush1.xpose.msra.mxu0 %v82
  %122 = vmatprep.subr.mxu0 0.0
  %123 = vmatpush1.xpose.msra.mxu0 %v85
  %124 = vmatprep.subr.mxu0 0.0
  %125 = vmatpush1.xpose.msra.mxu0 %v88
  %126 = vmatprep.subr.mxu0 0.0
  %127 = vmatpush1.xpose.msra.mxu0 %v91
  %128 = vmatprep.subr.mxu0 0.0
  %129 = vmatpush1.xpose.msra.mxu0 %v94
  %130 = vmatprep.subr.mxu0 0.0
  %131 = vmatpush1.xpose.msra.mxu0 %v97
  %132 = vmatprep.subr.mxu0 0.0
  %133 = vmatpush1.xpose.msra.mxu0 %v100
  %134 = vmatprep.subr.mxu0 0.0
  %135 = vmatpush1.xpose.msra.mxu0 0.0
  %136 = vmatprep.subr.mxu0 0.0
  %137 = vmatpush1.xpose.msra.mxu0 0.0
  %138 = vmatprep.subr.mxu0 0.0
  %139 = vmatpush1.xpose.msra.mxu0 0.0
  %140 = vmatprep.subr.mxu0 0.0
  %141 = vmatpush1.xpose.msra.mxu0 0.0
  %142 = vmatprep.subr.mxu0 0.0
  %143 = vmatpush1.xpose.msra.mxu0 0.0
  %144 = vmatprep.subr.mxu0 0.0
  %145 = vmatpush1.xpose.msra.mxu0 0.0
  %146 = vmatprep.subr.mxu0 0.0
  %147 = vmatpush1.xpose.msra.mxu0 0.0
  %148 = vmatprep.subr.mxu0 0.0
  %149 = vmatpush1.xpose.msra.mxu0 0.0
  %150 = vmatprep.subr.mxu0 0.0
  %151 = vmatpush1.xpose.msra.mxu0 0.0
  %152 = vmatprep.subr.mxu0 0.0
  %153 = vmatpush1.xpose.msra.mxu0 0.0
  %154 = vmatprep.subr.mxu0 0.0
  %155 = vmatpush1.xpose.msra.mxu0 0.0
  %156 = vmatprep.subr.mxu0 0.0
  %157 = vmatpush1.xpose.msra.mxu0 0.0
  %158 = vmatprep.subr.mxu0 0.0
  %159 = vmatpush1.xpose.msra.mxu0 0.0
  %160 = vmatprep.subr.mxu0 0.0
  %161 = vmatpush1.xpose.msra.mxu0 0.0
  %162 = vmatprep.subr.mxu0 0.0
  %163 = vmatpush1.xpose.msra.mxu0 0.0
  %164 = vmatprep.subr.mxu0 0.0
  %165 = vmatpush1.xpose.msra.mxu0 0.0
  %166 = vmatprep.mubr.f32.mxu0 0.0
  %167 = vmatmul.mubr.f32.gmra.mrb[0].mxu0 %v43
  %v168 = vpop.f32.mrb[0].mxu0
  %v169 = vadd.f32 %v39, %v168
  %v170 = vpop.f32.mrb[0].mxu0
  %171 = vmatprep.mubr.f32.mxu0 0.0
  %172 = vmatmul.mubr.f32.gmra.mrb[0].mxu0 %v46
  %v173 = vpop.f32.mrb[0].mxu0
  %v174 = vadd.f32 %v39, %v173
  %v175 = vpop.f32.mrb[0].mxu0
  %176 = vmatprep.mubr.f32.mxu0 0.0
  %177 = vmatmul.mubr.f32.gmra.mrb[0].mxu0 %v49
  %v178 = vpop.f32.mrb[0].mxu0
  %v179 = vadd.f32 %v39, %v178
  %v180 = vpop.f32.mrb[0].mxu0
  %181 = vmatprep.mubr.f32.mxu0 0.0
  %182 = vmatmul.mubr.f32.gmra.mrb[0].mxu0 %v52
  %v183 = vpop.f32.mrb[0].mxu0
  %v184 = vadd.f32 %v39, %v183
  %v185 = vpop.f32.mrb[0].mxu0
  %186 = vdwg.mxu0
  %187 = vst [vmem:[%s3] sm:$0xff] %v169
  %188 = vst [vmem:[%s3 + $0x8] sm:$0xff] %v174
  %189 = vst [vmem:[%s3 + $0x10] sm:$0xff] %v179
  %190 = vst [vmem:[%s3 + $0x18] sm:$0xff] %v184
  // Predicated region
  $region14: #{mesh_graph_edge_mlp_sum_forward.3} parent=0 // pred_check
    _
  $region15: #{mesh_graph_edge_mlp_sum_forward.3} parent=0 // pred_check_branch
    %192 = sbr.rel (0) target = $region17
  $region16: #{mesh_graph_edge_mlp_sum_forward.3} parent=0 // pred_region
    _
  $region17: #{mesh_graph_edge_mlp_sum_forward.3} parent=0 // pred_fallthru
    _
  // Predicated region
  $region18: #{mesh_graph_edge_mlp_sum_forward.3} parent=0 // pred_check
    _
  $region19: #{mesh_graph_edge_mlp_sum_forward.3} parent=0 // pred_check_branch
    %194 = sbr.rel (0) target = $region21
  $region20: #{mesh_graph_edge_mlp_sum_forward.3} parent=0 // pred_region
    _
  $region21: #{mesh_graph_edge_mlp_sum_forward.3} parent=0 // pred_fallthru
    _

// kernel: mesh_graph_edge_mlp_sum_forward.5
$region0: #{mesh_graph_edge_mlp_sum_forward.5}
  #allocation0 [shape = 'u32[]', space=smem, size = 0x4, offset = 0x4, fixed_abs, tag = 'smem constant byte address 0x4 - core index']
  #allocation1 [shape = 'u32[144,128]{1,0:T(1,128)}', space=vmem, size = 0x12000, scoped, tag = 'internal scratch']
  #allocation2 [shape = 'f32[64,128]{1,0:T(8,128)}', space=vmem, size = 0x8000, scoped, tag = 'scratch operand']
  #allocation3 [shape = 's32[1]{0}', space=sflag, size = 0x4, scoped, tag = 'scoped memory for mesh_graph_edge_mlp_sum_forward.5']
  #allocation4 [shape = 'u8[512]{0}', space=smem, size = 0x200, scoped, tag = 'prefetched SMEM operand 0']
  #allocation5 [shape = 'u8[512]{0}', space=smem, size = 0x200, scoped, tag = 'prefetched SMEM operand 1']
  %s0 = inlined_call_operand.vmem [shape: s32[64], index: 0, kind: input, shape index: {}]
  %s1 = inlined_call_operand.vmem [shape: s32[64], index: 1, kind: input, shape index: {}]
  %s2 = inlined_call_operand.vmem [shape: f32[64,16], index: 2, kind: input, shape index: {}]
  %s3 = inlined_call_operand.vmem [shape: f32[32,128], index: 3, kind: input, shape index: {}]
  %s4 = inlined_call_operand.vmem [shape: f32[32,128], index: 4, kind: input, shape index: {}]
  %s5 = inlined_call_operand.vmem [shape: f32[128,16], index: 5, kind: input, shape index: {}]
  %s6 = inlined_call_operand.vmem [shape: f32[128,128], index: 6, kind: input, shape index: {}]
  %s7 = inlined_call_operand.vmem [shape: f32[1,128], index: 7, kind: input, shape index: {}]
  %s8 = inlined_call_operand.vmem [shape: f32[128,128], index: 8, kind: input, shape index: {}]
  %s9 = inlined_call_operand.vmem [shape: f32[1,128], index: 9, kind: input, shape index: {}]
  %s10 = inlined_call_operand.vmem [shape: f32[1,128], index: 10, kind: input, shape index: {}]
  %s11 = inlined_call_operand.vmem [shape: f32[1,128], index: 11, kind: input, shape index: {}]
  %s12 = inlined_call_operand.vmem [shape: f32[64,128], index: 12, kind: output, shape index: {}]
  %s13 = sld [smem:[#allocation0]]
  $region57: #{mesh_graph_edge_mlp_sum_forward.5} parent=0
    _
  %s15 = ssub.s32 1, %s13
  %s16 = scalar_select 0, %s15, %s13
  %s17 = sshll.u32 %s0, 4
  %s18 = int_to_ptr.vmem [resolvable:$true] %s17
  %20 = dma.vmem_to_smem %s18, 16, [#allocation4], [#allocation3]
  %s21 = sshll.u32 %s1, 4
  %s22 = int_to_ptr.vmem [resolvable:$true] %s21
  %24 = dma.vmem_to_smem %s22, 16, [#allocation5], [#allocation3]
  %25 = dma.done [#allocation3], 32
  %26 = sfence
  // Predicated region
  $region2: #{mesh_graph_edge_mlp_sum_forward.5} parent=0 // pred_check
    _
  $region3: #{mesh_graph_edge_mlp_sum_forward.5} parent=0 // pred_check_branch
    %28 = sbr.rel (0) target = $region5
  $region4: #{mesh_graph_edge_mlp_sum_forward.5} parent=0 // pred_region
    _
  $region5: #{mesh_graph_edge_mlp_sum_forward.5} parent=0 // pred_fallthru
    _
  // Predicated region
  $region6: #{mesh_graph_edge_mlp_sum_forward.5} parent=0 // pred_check
    _
  $region7: #{mesh_graph_edge_mlp_sum_forward.5} parent=0 // pred_check_branch
    %30 = sbr.rel (0) target = $region9
  $region8: #{mesh_graph_edge_mlp_sum_forward.5} parent=0 // pred_region
    _
  $region9: #{mesh_graph_edge_mlp_sum_forward.5} parent=0 // pred_fallthru
    _
  // Predicated region
  $region10: #{mesh_graph_edge_mlp_sum_forward.5} parent=0 // pred_check
    _
  $region11: #{mesh_graph_edge_mlp_sum_forward.5} parent=0 // pred_check_branch
    %32 = sbr.rel (0) target = $region13
  $region12: #{mesh_graph_edge_mlp_sum_forward.5} parent=0 // pred_region
    _
  $region13: #{mesh_graph_edge_mlp_sum_forward.5} parent=0 // pred_fallthru
    _
  // Predicated region
  $region14: #{mesh_graph_edge_mlp_sum_forward.5} parent=0 // pred_check
    _
  $region15: #{mesh_graph_edge_mlp_sum_forward.5} parent=0 // pred_check_branch
    %34 = sbr.rel (0) target = $region17
  $region16: #{mesh_graph_edge_mlp_sum_forward.5} parent=0 // pred_region
    _
  $region17: #{mesh_graph_edge_mlp_sum_forward.5} parent=0 // pred_fallthru
    _
  // Predicated region
  $region18: #{mesh_graph_edge_mlp_sum_forward.5} parent=0 // pred_check
    _
  $region19: #{mesh_graph_edge_mlp_sum_forward.5} parent=0 // pred_check_branch
    %36 = sbr.rel (0) target = $region21
  $region20: #{mesh_graph_edge_mlp_sum_forward.5} parent=0 // pred_region
    _
  $region21: #{mesh_graph_edge_mlp_sum_forward.5} parent=0 // pred_fallthru
    _
  // Predicated region
  $region22: #{mesh_graph_edge_mlp_sum_forward.5} parent=0 // pred_check
    _
  $region23: #{mesh_graph_edge_mlp_sum_forward.5} parent=0 // pred_check_branch
    %38 = sbr.rel (0) target = $region25
  $region24: #{mesh_graph_edge_mlp_sum_forward.5} parent=0 // pred_region
    _
  $region25: #{mesh_graph_edge_mlp_sum_forward.5} parent=0 // pred_fallthru
    _
  // Predicated region
  $region26: #{mesh_graph_edge_mlp_sum_forward.5} parent=0 // pred_check
    _
  $region27: #{mesh_graph_edge_mlp_sum_forward.5} parent=0 // pred_check_branch
    %40 = sbr.rel (0) target = $region29
  $region28: #{mesh_graph_edge_mlp_sum_forward.5} parent=0 // pred_region
    _
  $region29: #{mesh_graph_edge_mlp_sum_forward.5} parent=0 // pred_fallthru
    _
  // Predicated region
  $region30: #{mesh_graph_edge_mlp_sum_forward.5} parent=0 // pred_check
    _
  $region31: #{mesh_graph_edge_mlp_sum_forward.5} parent=0 // pred_check_branch
    %42 = sbr.rel (0) target = $region33
  $region32: #{mesh_graph_edge_mlp_sum_forward.5} parent=0 // pred_region
    _
  $region33: #{mesh_graph_edge_mlp_sum_forward.5} parent=0 // pred_fallthru
    _
  // Predicated region
  $region34: #{mesh_graph_edge_mlp_sum_forward.5} parent=0 // pred_check
    _
  $region35: #{mesh_graph_edge_mlp_sum_forward.5} parent=0 // pred_check_branch
    %44 = sbr.rel (0) target = $region37
  $region36: #{mesh_graph_edge_mlp_sum_forward.5} parent=0 // pred_region
    _
  $region37: #{mesh_graph_edge_mlp_sum_forward.5} parent=0 // pred_fallthru
    _
  // Predicated region
  $region38: #{mesh_graph_edge_mlp_sum_forward.5} parent=0 // pred_check
    _
  $region39: #{mesh_graph_edge_mlp_sum_forward.5} parent=0 // pred_check_branch
    %46 = sbr.rel (0) target = $region41
  $region40: #{mesh_graph_edge_mlp_sum_forward.5} parent=0 // pred_region
    _
  $region41: #{mesh_graph_edge_mlp_sum_forward.5} parent=0 // pred_fallthru
    _
  %s47 = smul.u32 0, 64
  loop: start=0, step=1, limit=64
  $region42: #{mesh_graph_edge_mlp_sum_forward.5} parent=0 // loop_pre_header
    _
  $region43: #{mesh_graph_edge_mlp_sum_forward.5} parent=0 // loop_header
    %s49 = sphi 0, %s53
    %p50 = scmp.ge.s32.totalorder %s49, 64
  $region44: #{mesh_graph_edge_mlp_sum_forward.5} parent=0 // loop_header_branch
    %52 = sbr.rel (%p50) target = $region48
  $region45: #{mesh_graph_edge_mlp_sum_forward.5} parent=0 // loop_body
    %s54 = sadd.s32 %s47, %s49
    %s55 = sld [smem:[#allocation4 + %s54]]
    %s56 = sld [smem:[#allocation5 + %s54]]
    %s57 = scalar_lea.vmem %s3, %s55
    %v58 = vld [vmem:[%s57] sm:$0x1]
    %s59 = scalar_lea.vmem %s4, %s56
    %v60 = vld [vmem:[%s59] sm:$0x1]
    %v61 = vadd.f32 %v58, %v60
    %s62 = scalar_lea.vmem [#allocation2], %s49
    %63 = vst [vmem:[%s62] sm:$0x1] %v61
  $region46: #{mesh_graph_edge_mlp_sum_forward.5} parent=0 // loop_footer
    %s53 = sadd.s32 1, %s49
  $region47: #{mesh_graph_edge_mlp_sum_forward.5} parent=0 // loop_footer_branch
    %48 = sbr.rel target = $region43
  $region48: #{mesh_graph_edge_mlp_sum_forward.5} parent=0 // loop_exit
    _
  %v64 = vld [vmem:[%s2] sm:$0xff]
  %v65 = vld [vmem:[%s2 + $0x8] sm:$0xff]
  %v66 = vld [vmem:[%s2 + $0x10] sm:$0xff]
  %v67 = vld [vmem:[%s2 + $0x18] sm:$0xff]
  %v68 = vld [vmem:[%s2 + $0x20] sm:$0xff]
  %v69 = vld [vmem:[%s2 + $0x28] sm:$0xff]
  %v70 = vld [vmem:[%s2 + $0x30] sm:$0xff]
  %v71 = vld [vmem:[%s2 + $0x38] sm:$0xff]
  %v72 = vld [vmem:[%s5] sm:$0xff]
  %v73 = vld [vmem:[%s5 + $0x8] sm:$0xff]
  %v74 = vld [vmem:[%s5 + $0x10] sm:$0xff]
  %v75 = vld [vmem:[%s5 + $0x18] sm:$0xff]
  %v76 = vld [vmem:[%s5 + $0x20] sm:$0xff]
  %v77 = vld [vmem:[%s5 + $0x28] sm:$0xff]
  %v78 = vld [vmem:[%s5 + $0x30] sm:$0xff]
  %v79 = vld [vmem:[%s5 + $0x38] sm:$0xff]
  %v80 = vld [vmem:[%s5 + $0x40] sm:$0xff]
  %v81 = vld [vmem:[%s5 + $0x48] sm:$0xff]
  %v82 = vld [vmem:[%s5 + $0x50] sm:$0xff]
  %v83 = vld [vmem:[%s5 + $0x58] sm:$0xff]
  %v84 = vld [vmem:[%s5 + $0x60] sm:$0xff]
  %v85 = vld [vmem:[%s5 + $0x68] sm:$0xff]
  %v86 = vld [vmem:[%s5 + $0x70] sm:$0xff]
  %v87 = vld [vmem:[%s5 + $0x78] sm:$0xff]
  %v88 = vld [vmem:[#allocation2] sm:$0xff]
  %v89 = vld [vmem:[#allocation2 + $0x8] sm:$0xff]
  %v90 = vld [vmem:[#allocation2 + $0x10] sm:$0xff]
  %v91 = vld [vmem:[#allocation2 + $0x18] sm:$0xff]
  %v92 = vld [vmem:[#allocation2 + $0x20] sm:$0xff]
  %v93 = vld [vmem:[#allocation2 + $0x28] sm:$0xff]
  %v94 = vld [vmem:[#allocation2 + $0x30] sm:$0xff]
  %v95 = vld [vmem:[#allocation2 + $0x38] sm:$0xff]
  %vm96 = vcmask 130048
  %v98 = vsel %vm96, %v64, 0
  %v101 = vsel %vm96, %v65, 0
  %v104 = vsel %vm96, %v66, 0
  %v107 = vsel %vm96, %v67, 0
  %v110 = vsel %vm96, %v68, 0
  %v113 = vsel %vm96, %v69, 0
  %v116 = vsel %vm96, %v70, 0
  %v119 = vsel %vm96, %v71, 0
  %v122 = vsel %vm96, %v72, 0
  %v125 = vsel %vm96, %v73, 0
  %v128 = vsel %vm96, %v74, 0
  %v131 = vsel %vm96, %v75, 0
  %v134 = vsel %vm96, %v76, 0
  %v137 = vsel %vm96, %v77, 0
  %v140 = vsel %vm96, %v78, 0
  %v143 = vsel %vm96, %v79, 0
  %v146 = vsel %vm96, %v80, 0
  %v149 = vsel %vm96, %v81, 0
  %v152 = vsel %vm96, %v82, 0
  %v155 = vsel %vm96, %v83, 0
  %v158 = vsel %vm96, %v84, 0
  %v161 = vsel %vm96, %v85, 0
  %v164 = vsel %vm96, %v86, 0
  %v167 = vsel %vm96, %v87, 0
  %169 = vmatprep.subr.mxu0 0.0
  %170 = vmatpush1.xpose.msra.mxu0 %v122
  %171 = vmatprep.subr.mxu0 0.0
  %172 = vmatpush1.xpose.msra.mxu0 %v125
  %173 = vmatprep.subr.mxu0 0.0
  %174 = vmatpush1.xpose.msra.mxu0 %v128
  %175 = vmatprep.subr.mxu0 0.0
  %176 = vmatpush1.xpose.msra.mxu0 %v131
  %177 = vmatprep.subr.mxu0 0.0
  %178 = vmatpush1.xpose.msra.mxu0 %v134
  %179 = vmatprep.subr.mxu0 0.0
  %180 = vmatpush1.xpose.msra.mxu0 %v137
  %181 = vmatprep.subr.mxu0 0.0
  %182 = vmatpush1.xpose.msra.mxu0 %v140
  %183 = vmatprep.subr.mxu0 0.0
  %184 = vmatpush1.xpose.msra.mxu0 %v143
  %185 = vmatprep.subr.mxu0 0.0
  %186 = vmatpush1.xpose.msra.mxu0 %v146
  %187 = vmatprep.subr.mxu0 0.0
  %188 = vmatpush1.xpose.msra.mxu0 %v149
  %189 = vmatprep.subr.mxu0 0.0
  %190 = vmatpush1.xpose.msra.mxu0 %v152
  %191 = vmatprep.subr.mxu0 0.0
  %192 = vmatpush1.xpose.msra.mxu0 %v155
  %193 = vmatprep.subr.mxu0 0.0
  %194 = vmatpush1.xpose.msra.mxu0 %v158
  %195 = vmatprep.subr.mxu0 0.0
  %196 = vmatpush1.xpose.msra.mxu0 %v161
  %197 = vmatprep.subr.mxu0 0.0
  %198 = vmatpush1.xpose.msra.mxu0 %v164
  %199 = vmatprep.subr.mxu0 0.0
  %200 = vmatpush1.xpose.msra.mxu0 %v167
  %201 = vmatprep.subr.mxu0 0.0
  %202 = vmatpush1.xpose.msra.mxu0 0.0
  %203 = vmatprep.subr.mxu0 0.0
  %204 = vmatpush1.xpose.msra.mxu0 0.0
  %205 = vmatprep.subr.mxu0 0.0
  %206 = vmatpush1.xpose.msra.mxu0 0.0
  %207 = vmatprep.subr.mxu0 0.0
  %208 = vmatpush1.xpose.msra.mxu0 0.0
  %209 = vmatprep.subr.mxu0 0.0
  %210 = vmatpush1.xpose.msra.mxu0 0.0
  %211 = vmatprep.subr.mxu0 0.0
  %212 = vmatpush1.xpose.msra.mxu0 0.0
  %213 = vmatprep.subr.mxu0 0.0
  %214 = vmatpush1.xpose.msra.mxu0 0.0
  %215 = vmatprep.subr.mxu0 0.0
  %216 = vmatpush1.xpose.msra.mxu0 0.0
  %217 = vmatprep.subr.mxu0 0.0
  %218 = vmatpush1.xpose.msra.mxu0 0.0
  %219 = vmatprep.subr.mxu0 0.0
  %220 = vmatpush1.xpose.msra.mxu0 0.0
  %221 = vmatprep.subr.mxu0 0.0
  %222 = vmatpush1.xpose.msra.mxu0 0.0
  %223 = vmatprep.subr.mxu0 0.0
  %224 = vmatpush1.xpose.msra.mxu0 0.0
  %225 = vmatprep.subr.mxu0 0.0
  %226 = vmatpush1.xpose.msra.mxu0 0.0
  %227 = vmatprep.subr.mxu0 0.0
  %228 = vmatpush1.xpose.msra.mxu0 0.0
  %229 = vmatprep.subr.mxu0 0.0
  %230 = vmatpush1.xpose.msra.mxu0 0.0
  %231 = vmatprep.subr.mxu0 0.0
  %232 = vmatpush1.xpose.msra.mxu0 0.0
  %233 = vmatprep.mubr.f32.mxu0 0.0
  %234 = vmatmul.mubr.f32.gmra.mrb[0].mxu0 %v98
  %v235 = vpop.f32.mrb[0].mxu0
  %v236 = vadd.f32 %v88, %v235
  %v237 = vpop.f32.mrb[0].mxu0
  %238 = vmatprep.mubr.f32.mxu0 0.0
  %239 = vmatmul.mubr.f32.gmra.mrb[0].mxu0 %v101
  %v240 = vpop.f32.mrb[0].mxu0
  %v241 = vadd.f32 %v89, %v240
  %v242 = vpop.f32.mrb[0].mxu0
  %243 = vmatprep.mubr.f32.mxu0 0.0
  %244 = vmatmul.mubr.f32.gmra.mrb[0].mxu0 %v104
  %v245 = vpop.f32.mrb[0].mxu0
  %v246 = vadd.f32 %v90, %v245
  %v247 = vpop.f32.mrb[0].mxu0
  %248 = vmatprep.mubr.f32.mxu0 0.0
  %249 = vmatmul.mubr.f32.gmra.mrb[0].mxu0 %v107
  %v250 = vpop.f32.mrb[0].mxu0
  %v251 = vadd.f32 %v91, %v250
  %v252 = vpop.f32.mrb[0].mxu0
  %253 = vmatprep.mubr.f32.mxu0 0.0
  %254 = vmatmul.mubr.f32.gmra.mrb[0].mxu0 %v110
  %v255 = vpop.f32.mrb[0].mxu0
  %v256 = vadd.f32 %v92, %v255
  %v257 = vpop.f32.mrb[0].mxu0
  %258 = vmatprep.mubr.f32.mxu0 0.0
  %259 = vmatmul.mubr.f32.gmra.mrb[0].mxu0 %v113
  %v260 = vpop.f32.mrb[0].mxu0
  %v261 = vadd.f32 %v93, %v260
  %v262 = vpop.f32.mrb[0].mxu0
  %263 = vmatprep.mubr.f32.mxu0 0.0
  %264 = vmatmul.mubr.f32.gmra.mrb[0].mxu0 %v116
  %v265 = vpop.f32.mrb[0].mxu0
  %v266 = vadd.f32 %v94, %v265
  %v267 = vpop.f32.mrb[0].mxu0
  %268 = vmatprep.mubr.f32.mxu0 0.0
  %269 = vmatmul.mubr.f32.gmra.mrb[0].mxu0 %v119
  %v270 = vpop.f32.mrb[0].mxu0
  %v271 = vadd.f32 %v95, %v270
  %v272 = vpop.f32.mrb[0].mxu0
  %273 = vdwg.mxu0
  %v274 = vxor.u32 %v236, 2147483648
  %v275 = vxor.u32 %v241, 2147483648
  %v276 = vxor.u32 %v246, 2147483648
  %v277 = vxor.u32 %v251, 2147483648
  %v278 = vxor.u32 %v256, 2147483648
  %v279 = vxor.u32 %v261, 2147483648
  %v280 = vxor.u32 %v266, 2147483648
  %v281 = vxor.u32 %v271, 2147483648
  %v282 = vmul.f32 %v274, 1.442695
  %v283 = vpow.pop %v282
  %v284 = vmul.f32 %v275, 1.442695
  %v285 = vpow.pop %v284
  %v286 = vmul.f32 %v276, 1.442695
  %v287 = vpow.pop %v286
  %v288 = vmul.f32 %v277, 1.442695
  %v289 = vpow.pop %v288
  %v290 = vmul.f32 %v278, 1.442695
  %v291 = vpow.pop %v290
  %v292 = vmul.f32 %v279, 1.442695
  %v293 = vpow.pop %v292
  %v294 = vmul.f32 %v280, 1.442695
  %v295 = vpow.pop %v294
  %v296 = vmul.f32 %v281, 1.442695
  %v297 = vpow.pop %v296
  %v298 = vadd.f32 %v283, 1.0
  %v299 = vadd.f32 %v285, 1.0
  %v300 = vadd.f32 %v287, 1.0
  %v301 = vadd.f32 %v289, 1.0
  %v302 = vadd.f32 %v291, 1.0
  %v303 = vadd.f32 %v293, 1.0
  %v304 = vadd.f32 %v295, 1.0
  %v305 = vadd.f32 %v297, 1.0
  %v306 = vrcp.pop %v298
  %v307 = vmul.f32 1.0, %v306
  %v308 = vrcp.pop %v299
  %v309 = vmul.f32 1.0, %v308
  %v310 = vrcp.pop %v300
  %v311 = vmul.f32 1.0, %v310
  %v312 = vrcp.pop %v301
  %v313 = vmul.f32 1.0, %v312
  %v314 = vrcp.pop %v302
  %v315 = vmul.f32 1.0, %v314
  %v316 = vrcp.pop %v303
  %v317 = vmul.f32 1.0, %v316
  %v318 = vrcp.pop %v304
  %v319 = vmul.f32 1.0, %v318
  %v320 = vrcp.pop %v305
  %v321 = vmul.f32 1.0, %v320
  %v322 = vmul.f32 %v236, %v307
  %v323 = vmul.f32 %v241, %v309
  %v324 = vmul.f32 %v246, %v311
  %v325 = vmul.f32 %v251, %v313
  %v326 = vmul.f32 %v256, %v315
  %v327 = vmul.f32 %v261, %v317
  %v328 = vmul.f32 %v266, %v319
  %v329 = vmul.f32 %v271, %v321
  %v330 = vld [vmem:[%s6] sm:$0xff]
  %v331 = vld [vmem:[%s6 + $0x8] sm:$0xff]
  %v332 = vld [vmem:[%s6 + $0x10] sm:$0xff]
  %v333 = vld [vmem:[%s6 + $0x18] sm:$0xff]
  %v334 = vld [vmem:[%s6 + $0x20] sm:$0xff]
  %v335 = vld [vmem:[%s6 + $0x28] sm:$0xff]
  %v336 = vld [vmem:[%s6 + $0x30] sm:$0xff]
  %v337 = vld [vmem:[%s6 + $0x38] sm:$0xff]
  %v338 = vld [vmem:[%s6 + $0x40] sm:$0xff]
  %v339 = vld [vmem:[%s6 + $0x48] sm:$0xff]
  %v340 = vld [vmem:[%s6 + $0x50] sm:$0xff]
  %v341 = vld [vmem:[%s6 + $0x58] sm:$0xff]
  %v342 = vld [vmem:[%s6 + $0x60] sm:$0xff]
  %v343 = vld [vmem:[%s6 + $0x68] sm:$0xff]
  %v344 = vld [vmem:[%s6 + $0x70] sm:$0xff]
  %v345 = vld [vmem:[%s6 + $0x78] sm:$0xff]
  %v346 = vld [vmem:[%s7] sm:$0x1]
  %v348 = vlaneseq
  %v349 = vshrl.u32 %v348, 7
  %v350 = vsub.s32 0, %v349
  %v351 = vrot.slane %v346, %v350
  %353 = vmatprep.subr.mxu0 0.0
  %354 = vmatpush1.xpose.msra.mxu0 %v330
  %355 = vmatprep.subr.mxu0 0.0
  %356 = vmatpush1.xpose.msra.mxu0 %v331
  %357 = vmatprep.subr.mxu0 0.0
  %358 = vmatpush1.xpose.msra.mxu0 %v332
  %359 = vmatprep.subr.mxu0 0.0
  %360 = vmatpush1.xpose.msra.mxu0 %v333
  %361 = vmatprep.subr.mxu0 0.0
  %362 = vmatpush1.xpose.msra.mxu0 %v334
  %363 = vmatprep.subr.mxu0 0.0
  %364 = vmatpush1.xpose.msra.mxu0 %v335
  %365 = vmatprep.subr.mxu0 0.0
  %366 = vmatpush1.xpose.msra.mxu0 %v336
  %367 = vmatprep.subr.mxu0 0.0
  %368 = vmatpush1.xpose.msra.mxu0 %v337
  %369 = vmatprep.subr.mxu0 0.0
  %370 = vmatpush1.xpose.msra.mxu0 %v338
  %371 = vmatprep.subr.mxu0 0.0
  %372 = vmatpush1.xpose.msra.mxu0 %v339
  %373 = vmatprep.subr.mxu0 0.0
  %374 = vmatpush1.xpose.msra.mxu0 %v340
  %375 = vmatprep.subr.mxu0 0.0
  %376 = vmatpush1.xpose.msra.mxu0 %v341
  %377 = vmatprep.subr.mxu0 0.0
  %378 = vmatpush1.xpose.msra.mxu0 %v342
  %379 = vmatprep.subr.mxu0 0.0
  %380 = vmatpush1.xpose.msra.mxu0 %v343
  %381 = vmatprep.subr.mxu0 0.0
  %382 = vmatpush1.xpose.msra.mxu0 %v344
  %383 = vmatprep.subr.mxu0 0.0
  %384 = vmatpush1.xpose.msra.mxu0 %v345
  %385 = vmatprep.subr.mxu0 0.0
  %386 = vmatpush1.xpose.msra.mxu0 0.0
  %387 = vmatprep.subr.mxu0 0.0
  %388 = vmatpush1.xpose.msra.mxu0 0.0
  %389 = vmatprep.subr.mxu0 0.0
  %390 = vmatpush1.xpose.msra.mxu0 0.0
  %391 = vmatprep.subr.mxu0 0.0
  %392 = vmatpush1.xpose.msra.mxu0 0.0
  %393 = vmatprep.subr.mxu0 0.0
  %394 = vmatpush1.xpose.msra.mxu0 0.0
  %395 = vmatprep.subr.mxu0 0.0
  %396 = vmatpush1.xpose.msra.mxu0 0.0
  %397 = vmatprep.subr.mxu0 0.0
  %398 = vmatpush1.xpose.msra.mxu0 0.0
  %399 = vmatprep.subr.mxu0 0.0
  %400 = vmatpush1.xpose.msra.mxu0 0.0
  %401 = vmatprep.subr.mxu0 0.0
  %402 = vmatpush1.xpose.msra.mxu0 0.0
  %403 = vmatprep.subr.mxu0 0.0
  %404 = vmatpush1.xpose.msra.mxu0 0.0
  %405 = vmatprep.subr.mxu0 0.0
  %406 = vmatpush1.xpose.msra.mxu0 0.0
  %407 = vmatprep.subr.mxu0 0.0
  %408 = vmatpush1.xpose.msra.mxu0 0.0
  %409 = vmatprep.subr.mxu0 0.0
  %410 = vmatpush1.xpose.msra.mxu0 0.0
  %411 = vmatprep.subr.mxu0 0.0
  %412 = vmatpush1.xpose.msra.mxu0 0.0
  %413 = vmatprep.subr.mxu0 0.0
  %414 = vmatpush1.xpose.msra.mxu0 0.0
  %415 = vmatprep.subr.mxu0 0.0
  %416 = vmatpush1.xpose.msra.mxu0 0.0
  %417 = vmatprep.mubr.f32.mxu0 0.0
  %418 = vmatmul.mubr.f32.gmra.mrb[0].mxu0 %v322
  %v419 = vpop.f32.mrb[0].mxu0
  %v420 = vadd.f32 %v351, %v419
  %v421 = vpop.f32.mrb[0].mxu0
  %422 = vmatprep.mubr.f32.mxu0 0.0
  %423 = vmatmul.mubr.f32.gmra.mrb[0].mxu0 %v323
  %v424 = vpop.f32.mrb[0].mxu0
  %v425 = vadd.f32 %v351, %v424
  %v426 = vpop.f32.mrb[0].mxu0
  %427 = vmatprep.mubr.f32.mxu0 0.0
  %428 = vmatmul.mubr.f32.gmra.mrb[0].mxu0 %v324
  %v429 = vpop.f32.mrb[0].mxu0
  %v430 = vadd.f32 %v351, %v429
  %v431 = vpop.f32.mrb[0].mxu0
  %432 = vmatprep.mubr.f32.mxu0 0.0
  %433 = vmatmul.mubr.f32.gmra.mrb[0].mxu0 %v325
  %v434 = vpop.f32.mrb[0].mxu0
  %v435 = vadd.f32 %v351, %v434
  %v436 = vpop.f32.mrb[0].mxu0
  %437 = vmatprep.mubr.f32.mxu0 0.0
  %438 = vmatmul.mubr.f32.gmra.mrb[0].mxu0 %v326
  %v439 = vpop.f32.mrb[0].mxu0
  %v440 = vadd.f32 %v351, %v439
  %v441 = vpop.f32.mrb[0].mxu0
  %442 = vmatprep.mubr.f32.mxu0 0.0
  %443 = vmatmul.mubr.f32.gmra.mrb[0].mxu0 %v327
  %v444 = vpop.f32.mrb[0].mxu0
  %v445 = vadd.f32 %v351, %v444
  %v446 = vpop.f32.mrb[0].mxu0
  %447 = vmatprep.mubr.f32.mxu0 0.0
  %448 = vmatmul.mubr.f32.gmra.mrb[0].mxu0 %v328
  %v449 = vpop.f32.mrb[0].mxu0
  %v450 = vadd.f32 %v351, %v449
  %v451 = vpop.f32.mrb[0].mxu0
  %452 = vmatprep.mubr.f32.mxu0 0.0
  %453 = vmatmul.mubr.f32.gmra.mrb[0].mxu0 %v329
  %v454 = vpop.f32.mrb[0].mxu0
  %v455 = vadd.f32 %v351, %v454
  %v456 = vpop.f32.mrb[0].mxu0
  %457 = vdwg.mxu0
  %v458 = vxor.u32 %v420, 2147483648
  %v459 = vxor.u32 %v425, 2147483648
  %v460 = vxor.u32 %v430, 2147483648
  %v461 = vxor.u32 %v435, 2147483648
  %v462 = vxor.u32 %v440, 2147483648
  %v463 = vxor.u32 %v445, 2147483648
  %v464 = vxor.u32 %v450, 2147483648
  %v465 = vxor.u32 %v455, 2147483648
  %v466 = vmul.f32 %v458, 1.442695
  %v467 = vpow.pop %v466
  %v468 = vmul.f32 %v459, 1.442695
  %v469 = vpow.pop %v468
  %v470 = vmul.f32 %v460, 1.442695
  %v471 = vpow.pop %v470
  %v472 = vmul.f32 %v461, 1.442695
  %v473 = vpow.pop %v472
  %v474 = vmul.f32 %v462, 1.442695
  %v475 = vpow.pop %v474
  %v476 = vmul.f32 %v463, 1.442695
  %v477 = vpow.pop %v476
  %v478 = vmul.f32 %v464, 1.442695
  %v479 = vpow.pop %v478
  %v480 = vmul.f32 %v465, 1.442695
  %v481 = vpow.pop %v480
  %v482 = vadd.f32 %v467, 1.0
  %v483 = vadd.f32 %v469, 1.0
  %v484 = vadd.f32 %v471, 1.0
  %v485 = vadd.f32 %v473, 1.0
  %v486 = vadd.f32 %v475, 1.0
  %v487 = vadd.f32 %v477, 1.0
  %v488 = vadd.f32 %v479, 1.0
  %v489 = vadd.f32 %v481, 1.0
  %v490 = vrcp.pop %v482
  %v491 = vmul.f32 1.0, %v490
  %v492 = vrcp.pop %v483
  %v493 = vmul.f32 1.0, %v492
  %v494 = vrcp.pop %v484
  %v495 = vmul.f32 1.0, %v494
  %v496 = vrcp.pop %v485
  %v497 = vmul.f32 1.0, %v496
  %v498 = vrcp.pop %v486
  %v499 = vmul.f32 1.0, %v498
  %v500 = vrcp.pop %v487
  %v501 = vmul.f32 1.0, %v500
  %v502 = vrcp.pop %v488
  %v503 = vmul.f32 1.0, %v502
  %v504 = vrcp.pop %v489
  %v505 = vmul.f32 1.0, %v504
  %v506 = vmul.f32 %v420, %v491
  %v507 = vmul.f32 %v425, %v493
  %v508 = vmul.f32 %v430, %v495
  %v509 = vmul.f32 %v435, %v497
  %v510 = vmul.f32 %v440, %v499
  %v511 = vmul.f32 %v445, %v501
  %v512 = vmul.f32 %v450, %v503
  %v513 = vmul.f32 %v455, %v505
  %v514 = vld [vmem:[%s8] sm:$0xff]
  %v515 = vld [vmem:[%s8 + $0x8] sm:$0xff]
  %v516 = vld [vmem:[%s8 + $0x10] sm:$0xff]
  %v517 = vld [vmem:[%s8 + $0x18] sm:$0xff]
  %v518 = vld [vmem:[%s8 + $0x20] sm:$0xff]
  %v519 = vld [vmem:[%s8 + $0x28] sm:$0xff]
  %v520 = vld [vmem:[%s8 + $0x30] sm:$0xff]
  %v521 = vld [vmem:[%s8 + $0x38] sm:$0xff]
  %v522 = vld [vmem:[%s8 + $0x40] sm:$0xff]
  %v523 = vld [vmem:[%s8 + $0x48] sm:$0xff]
  %v524 = vld [vmem:[%s8 + $0x50] sm:$0xff]
  %v525 = vld [vmem:[%s8 + $0x58] sm:$0xff]
  %v526 = vld [vmem:[%s8 + $0x60] sm:$0xff]
  %v527 = vld [vmem:[%s8 + $0x68] sm:$0xff]
  %v528 = vld [vmem:[%s8 + $0x70] sm:$0xff]
  %v529 = vld [vmem:[%s8 + $0x78] sm:$0xff]
  %v530 = vld [vmem:[%s9] sm:$0x1]
  %v532 = vlaneseq
  %v533 = vshrl.u32 %v532, 7
  %v534 = vsub.s32 0, %v533
  %v535 = vrot.slane %v530, %v534
  %537 = vmatprep.subr.mxu0 0.0
  %538 = vmatpush1.xpose.msra.mxu0 %v514
  %539 = vmatprep.subr.mxu0 0.0
  %540 = vmatpush1.xpose.msra.mxu0 %v515
  %541 = vmatprep.subr.mxu0 0.0
  %542 = vmatpush1.xpose.msra.mxu0 %v516
  %543 = vmatprep.subr.mxu0 0.0
  %544 = vmatpush1.xpose.msra.mxu0 %v517
  %545 = vmatprep.subr.mxu0 0.0
  %546 = vmatpush1.xpose.msra.mxu0 %v518
  %547 = vmatprep.subr.mxu0 0.0
  %548 = vmatpush1.xpose.msra.mxu0 %v519
  %549 = vmatprep.subr.mxu0 0.0
  %550 = vmatpush1.xpose.msra.mxu0 %v520
  %551 = vmatprep.subr.mxu0 0.0
  %552 = vmatpush1.xpose.msra.mxu0 %v521
  %553 = vmatprep.subr.mxu0 0.0
  %554 = vmatpush1.xpose.msra.mxu0 %v522
  %555 = vmatprep.subr.mxu0 0.0
  %556 = vmatpush1.xpose.msra.mxu0 %v523
  %557 = vmatprep.subr.mxu0 0.0
  %558 = vmatpush1.xpose.msra.mxu0 %v524
  %559 = vmatprep.subr.mxu0 0.0
  %560 = vmatpush1.xpose.msra.mxu0 %v525
  %561 = vmatprep.subr.mxu0 0.0
  %562 = vmatpush1.xpose.msra.mxu0 %v526
  %563 = vmatprep.subr.mxu0 0.0
  %564 = vmatpush1.xpose.msra.mxu0 %v527
  %565 = vmatprep.subr.mxu0 0.0
  %566 = vmatpush1.xpose.msra.mxu0 %v528
  %567 = vmatprep.subr.mxu0 0.0
  %568 = vmatpush1.xpose.msra.mxu0 %v529
  %569 = vmatprep.subr.mxu0 0.0
  %570 = vmatpush1.xpose.msra.mxu0 0.0
  %571 = vmatprep.subr.mxu0 0.0
  %572 = vmatpush1.xpose.msra.mxu0 0.0
  %573 = vmatprep.subr.mxu0 0.0
  %574 = vmatpush1.xpose.msra.mxu0 0.0
  %575 = vmatprep.subr.mxu0 0.0
  %576 = vmatpush1.xpose.msra.mxu0 0.0
  %577 = vmatprep.subr.mxu0 0.0
  %578 = vmatpush1.xpose.msra.mxu0 0.0
  %579 = vmatprep.subr.mxu0 0.0
  %580 = vmatpush1.xpose.msra.mxu0 0.0
  %581 = vmatprep.subr.mxu0 0.0
  %582 = vmatpush1.xpose.msra.mxu0 0.0
  %583 = vmatprep.subr.mxu0 0.0
  %584 = vmatpush1.xpose.msra.mxu0 0.0
  %585 = vmatprep.subr.mxu0 0.0
  %586 = vmatpush1.xpose.msra.mxu0 0.0
  %587 = vmatprep.subr.mxu0 0.0
  %588 = vmatpush1.xpose.msra.mxu0 0.0
  %589 = vmatprep.subr.mxu0 0.0
  %590 = vmatpush1.xpose.msra.mxu0 0.0
  %591 = vmatprep.subr.mxu0 0.0
  %592 = vmatpush1.xpose.msra.mxu0 0.0
  %593 = vmatprep.subr.mxu0 0.0
  %594 = vmatpush1.xpose.msra.mxu0 0.0
  %595 = vmatprep.subr.mxu0 0.0
  %596 = vmatpush1.xpose.msra.mxu0 0.0
  %597 = vmatprep.subr.mxu0 0.0
  %598 = vmatpush1.xpose.msra.mxu0 0.0
  %599 = vmatprep.subr.mxu0 0.0
  %600 = vmatpush1.xpose.msra.mxu0 0.0
  %601 = vmatprep.mubr.f32.mxu0 0.0
  %602 = vmatmul.mubr.f32.gmra.mrb[0].mxu0 %v506
  %v603 = vpop.f32.mrb[0].mxu0
  %v604 = vadd.f32 %v535, %v603
  %v605 = vpop.f32.mrb[0].mxu0
  %606 = vmatprep.mubr.f32.mxu0 0.0
  %607 = vmatmul.mubr.f32.gmra.mrb[0].mxu0 %v507
  %v608 = vpop.f32.mrb[0].mxu0
  %v609 = vadd.f32 %v535, %v608
  %v610 = vpop.f32.mrb[0].mxu0
  %611 = vmatprep.mubr.f32.mxu0 0.0
  %612 = vmatmul.mubr.f32.gmra.mrb[0].mxu0 %v508
  %v613 = vpop.f32.mrb[0].mxu0
  %v614 = vadd.f32 %v535, %v613
  %v615 = vpop.f32.mrb[0].mxu0
  %616 = vmatprep.mubr.f32.mxu0 0.0
  %617 = vmatmul.mubr.f32.gmra.mrb[0].mxu0 %v509
  %v618 = vpop.f32.mrb[0].mxu0
  %v619 = vadd.f32 %v535, %v618
  %v620 = vpop.f32.mrb[0].mxu0
  %621 = vmatprep.mubr.f32.mxu0 0.0
  %622 = vmatmul.mubr.f32.gmra.mrb[0].mxu0 %v510
  %v623 = vpop.f32.mrb[0].mxu0
  %v624 = vadd.f32 %v535, %v623
  %v625 = vpop.f32.mrb[0].mxu0
  %626 = vmatprep.mubr.f32.mxu0 0.0
  %627 = vmatmul.mubr.f32.gmra.mrb[0].mxu0 %v511
  %v628 = vpop.f32.mrb[0].mxu0
  %v629 = vadd.f32 %v535, %v628
  %v630 = vpop.f32.mrb[0].mxu0
  %631 = vmatprep.mubr.f32.mxu0 0.0
  %632 = vmatmul.mubr.f32.gmra.mrb[0].mxu0 %v512
  %v633 = vpop.f32.mrb[0].mxu0
  %v634 = vadd.f32 %v535, %v633
  %v635 = vpop.f32.mrb[0].mxu0
  %636 = vmatprep.mubr.f32.mxu0 0.0
  %637 = vmatmul.mubr.f32.gmra.mrb[0].mxu0 %v513
  %v638 = vpop.f32.mrb[0].mxu0
  %v639 = vadd.f32 %v535, %v638
  %v640 = vpop.f32.mrb[0].mxu0
  %641 = vdwg.mxu0
  %v642 = vlaneseq
  %v643 = vand.u32 %v642, 127
  %vm644 = vcmp.lt.s32.totalorder %v643, 32
  %v645 = vsel %vm644, %v604, 0.0
  %v646 = vsel %vm644, %v609, 0.0
  %v647 = vsel %vm644, %v614, 0.0
  %v648 = vsel %vm644, %v619, 0.0
  %v649 = vsel %vm644, %v624, 0.0
  %v650 = vsel %vm644, %v629, 0.0
  %v651 = vsel %vm644, %v634, 0.0
  %v652 = vsel %vm644, %v639, 0.0
  %653 = vadd.xlane.f32.xlu0 %v645
  %v654 = vpop.xlane.xlu0 %653
  %655 = vadd.xlane.f32.xlu0 %v646
  %v656 = vpop.xlane.xlu0 %655
  %657 = vadd.xlane.f32.xlu0 %v647
  %v658 = vpop.xlane.xlu0 %657
  %659 = vadd.xlane.f32.xlu0 %v648
  %v660 = vpop.xlane.xlu0 %659
  %661 = vadd.xlane.f32.xlu0 %v649
  %v662 = vpop.xlane.xlu0 %661
  %663 = vadd.xlane.f32.xlu0 %v650
  %v664 = vpop.xlane.xlu0 %663
  %665 = vadd.xlane.f32.xlu0 %v651
  %v666 = vpop.xlane.xlu0 %665
  %667 = vadd.xlane.f32.xlu0 %v652
  %v668 = vpop.xlane.xlu0 %667
  %v669 = vmul.f32 %v654, 0.03125
  %v670 = vmul.f32 %v656, 0.03125
  %v671 = vmul.f32 %v658, 0.03125
  %v672 = vmul.f32 %v660, 0.03125
  %v673 = vmul.f32 %v662, 0.03125
  %v674 = vmul.f32 %v664, 0.03125
  %v675 = vmul.f32 %v666, 0.03125
  %v676 = vmul.f32 %v668, 0.03125
  %v677 = vsub.f32 %v604, %v669
  %v678 = vsub.f32 %v609, %v670
  %v679 = vsub.f32 %v614, %v671
  %v680 = vsub.f32 %v619, %v672
  %v681 = vsub.f32 %v624, %v673
  %v682 = vsub.f32 %v629, %v674
  %v683 = vsub.f32 %v634, %v675
  %v684 = vsub.f32 %v639, %v676
  %v685 = vsel %vm644, %v677, 0.0
  %v686 = vsel %vm644, %v678, 0.0
  %v687 = vsel %vm644, %v679, 0.0
  %v688 = vsel %vm644, %v680, 0.0
  %v689 = vsel %vm644, %v681, 0.0
  %v690 = vsel %vm644, %v682, 0.0
  %v691 = vsel %vm644, %v683, 0.0
  %v692 = vsel %vm644, %v684, 0.0
  %v693 = vmul.f32 %v685, %v685
  %v694 = vmul.f32 %v686, %v686
  %v695 = vmul.f32 %v687, %v687
  %v696 = vmul.f32 %v688, %v688
  %v697 = vmul.f32 %v689, %v689
  %v698 = vmul.f32 %v690, %v690
  %v699 = vmul.f32 %v691, %v691
  %v700 = vmul.f32 %v692, %v692
  %701 = vadd.xlane.f32.xlu0 %v693
  %v702 = vpop.xlane.xlu0 %701
  %703 = vadd.xlane.f32.xlu0 %v694
  %v704 = vpop.xlane.xlu0 %703
  %705 = vadd.xlane.f32.xlu0 %v695
  %v706 = vpop.xlane.xlu0 %705
  %707 = vadd.xlane.f32.xlu0 %v696
  %v708 = vpop.xlane.xlu0 %707
  %709 = vadd.xlane.f32.xlu0 %v697
  %v710 = vpop.xlane.xlu0 %709
  %711 = vadd.xlane.f32.xlu0 %v698
  %v712 = vpop.xlane.xlu0 %711
  %713 = vadd.xlane.f32.xlu0 %v699
  %v714 = vpop.xlane.xlu0 %713
  %715 = vadd.xlane.f32.xlu0 %v700
  %v716 = vpop.xlane.xlu0 %715
  %v717 = vmul.f32 %v702, 0.03125
  %v718 = vmul.f32 %v704, 0.03125
  %v719 = vmul.f32 %v706, 0.03125
  %v720 = vmul.f32 %v708, 0.03125
  %v721 = vmul.f32 %v710, 0.03125
  %v722 = vmul.f32 %v712, 0.03125
  %v723 = vmul.f32 %v714, 0.03125
  %v724 = vmul.f32 %v716, 0.03125
  %v725 = vadd.f32 %v717, 1e-05
  %v726 = vadd.f32 %v718, 1e-05
  %v727 = vadd.f32 %v719, 1e-05
  %v728 = vadd.f32 %v720, 1e-05
  %v729 = vadd.f32 %v721, 1e-05
  %v730 = vadd.f32 %v722, 1e-05
  %v731 = vadd.f32 %v723, 1e-05
  %v732 = vadd.f32 %v724, 1e-05
  %v733 = vrsqrt.pop %v725
  %v734 = vrsqrt.pop %v726
  %v735 = vrsqrt.pop %v727
  %v736 = vrsqrt.pop %v728
  %v737 = vrsqrt.pop %v729
  %v738 = vrsqrt.pop %v730
  %v739 = vrsqrt.pop %v731
  %v740 = vrsqrt.pop %v732
  %v741 = vmul.f32 %v685, %v733
  %v742 = vmul.f32 %v686, %v734
  %v743 = vmul.f32 %v687, %v735
  %v744 = vmul.f32 %v688, %v736
  %v745 = vmul.f32 %v689, %v737
  %v746 = vmul.f32 %v690, %v738
  %v747 = vmul.f32 %v691, %v739
  %v748 = vmul.f32 %v692, %v740
  %v749 = vld [vmem:[%s10] sm:$0x1]
  %v751 = vlaneseq
  %v752 = vshrl.u32 %v751, 7
  %v753 = vsub.s32 0, %v752
  %v754 = vrot.slane %v749, %v753
  %v756 = vmul.f32 %v741, %v754
  %v757 = vmul.f32 %v742, %v754
  %v758 = vmul.f32 %v743, %v754
  %v759 = vmul.f32 %v744, %v754
  %v760 = vmul.f32 %v745, %v754
  %v761 = vmul.f32 %v746, %v754
  %v762 = vmul.f32 %v747, %v754
  %v763 = vmul.f32 %v748, %v754
  %v764 = vld [vmem:[%s11] sm:$0x1]
  %v766 = vlaneseq
  %v767 = vshrl.u32 %v766, 7
  %v768 = vsub.s32 0, %v767
  %v769 = vrot.slane %v764, %v768
  %v771 = vadd.f32 %v756, %v769
  %v772 = vadd.f32 %v757, %v769
  %v773 = vadd.f32 %v758, %v769
  %v774 = vadd.f32 %v759, %v769
  %v775 = vadd.f32 %v760, %v769
  %v776 = vadd.f32 %v761, %v769
  %v777 = vadd.f32 %v762, %v769
  %v778 = vadd.f32 %v763, %v769
  %779 = vst [vmem:[%s12] sm:$0xff] %v771
  %780 = vst [vmem:[%s12 + $0x8] sm:$0xff] %v772
  %781 = vst [vmem:[%s12 + $0x10] sm:$0xff] %v773
  %782 = vst [vmem:[%s12 + $0x18] sm:$0xff] %v774
  %783 = vst [vmem:[%s12 + $0x20] sm:$0xff] %v775
  %784 = vst [vmem:[%s12 + $0x28] sm:$0xff] %v776
  %785 = vst [vmem:[%s12 + $0x30] sm:$0xff] %v777
  %786 = vst [vmem:[%s12 + $0x38] sm:$0xff] %v778
  // Predicated region
  $region49: #{mesh_graph_edge_mlp_sum_forward.5} parent=0 // pred_check
    _
  $region50: #{mesh_graph_edge_mlp_sum_forward.5} parent=0 // pred_check_branch
    %788 = sbr.rel (0) target = $region52
  $region51: #{mesh_graph_edge_mlp_sum_forward.5} parent=0 // pred_region
    _
  $region52: #{mesh_graph_edge_mlp_sum_forward.5} parent=0 // pred_fallthru
    _
  // Predicated region
  $region53: #{mesh_graph_edge_mlp_sum_forward.5} parent=0 // pred_check
    _
  $region54: #{mesh_graph_edge_mlp_sum_forward.5} parent=0 // pred_check_branch
    %790 = sbr.rel (0) target = $region56
  $region55: #{mesh_graph_edge_mlp_sum_forward.5} parent=0 // pred_region
    _
  $region56: #{mesh_graph_edge_mlp_sum_forward.5} parent=0 // pred_fallthru
    _

</llo_original>
